<compile_context>
chip_gen: v6e
topology: v6e:2x2x1
jax: 0.10.0
libtpu: 0.0.40
codegen_flags: <defaults>
</compile_context>

<pallas_src>
import functools

import jax
import jax.numpy as jnp
from jax.experimental import pallas as pl
from jax.experimental.pallas import tpu as pltpu


def _round_up(x, m):
    return (x + m - 1) // m * m


def _embed_pe_kernel(seed_ref, ids_ref, table_ref, out_ref, *, p, training):
    # seed_ref : SMEM scalar-prefetch, shape (1,) int32
    # ids_ref  : (tn, 1) int32   -- block of flattened (and possibly padded) time_ids
    # table_ref: (V, D)  float32 -- full embedding table, resident every grid step
    # out_ref  : (tn, D) float32
    ids = ids_ref[...]                                             # (tn, 1)
    tn = ids.shape[0]
    v = table_ref.shape[0]

    # One-hot gather via MXU matmul. Note: out-of-range ids silently produce an
    # all-zero row (PyTorch would raise); inputs are assumed in [0, V).
    iota_v = jax.lax.broadcasted_iota(jnp.int32, (tn, v), 1)       # (tn, V)
    onehot = (iota_v == ids).astype(table_ref.dtype)               # (tn, V)
    emb = jnp.dot(onehot, table_ref[...],
                  preferred_element_type=jnp.float32)              # (tn, D)

    if training and p > 0.0:
        d = emb.shape[1]
        seed = seed_ref[0].astype(jnp.uint32)
        base_row = (pl.program_id(0) * tn).astype(jnp.uint32)
        rows = jax.lax.broadcasted_iota(jnp.uint32, (tn, d), 0) + base_row
        cols = jax.lax.broadcasted_iota(jnp.uint32, (tn, d), 1)
        # Stateless counter-based hash (murmur3 fmix32) of the global element index.
        h = rows * jnp.uint32(d) + cols
        h = h + seed * jnp.uint32(0x9E3779B9)
        h = h ^ (h >> 16)
        h = h * jnp.uint32(0x85EBCA6B)
        h = h ^ (h >> 13)
        h = h * jnp.uint32(0xC2B2AE35)
        h = h ^ (h >> 16)
        # Integer-domain keep decision: P(keep) = 1 - p.
        threshold = jnp.uint32(min(int(round(p * 4294967296.0)), 4294967295))
        keep = h >= threshold
        emb = jnp.where(keep, emb * jnp.float32(1.0 / (1.0 - p)), jnp.float32(0.0))

    out_ref[...] = emb.astype(out_ref.dtype)


def embedding_positional_encoding(time_ids, pe_weight, *, dropout_p=0.1,
                                  training=False, seed=0, row_tile=256):
    """Forward pass of EmbeddingPositionalEncoding.

    time_ids : [B, S] int32
    pe_weight: [num_embedding, d_model] float32
    returns  : [B, S, d_model] float32
    """
    B, S = time_ids.shape
    V, D = pe_weight.shape
    N = B * S

    # Row tile: as large as requested (default 256 => fills MXU M dim, amortizes
    # the ~0.35us per-grid-step overhead), shrunk + 8-aligned for small inputs.
    tn = min(int(row_tile), _round_up(N, 8))
    tn = _round_up(tn, 8)
    Np = _round_up(N, tn)

    ids_flat = time_ids.reshape(N).astype(jnp.int32)
    if Np != N:
        ids_flat = jnp.pad(ids_flat, (0, Np - N))                  # pad with id 0
    ids_flat = ids_flat.reshape(Np, 1)

    grid = (Np // tn,)

    kernel = functools.partial(_embed_pe_kernel,
                               p=float(dropout_p), training=bool(training))

    # Explicit scoped-VMEM budget: resident table (double-buffered worst case) +
    # double-buffered (tn,D) output + (tn,1)->128-lane-padded ids + one-hot temp,
    # with 2x headroom, capped at v7x's 64 MiB physical VMEM.
    table_bytes = V * D * 4
    out_tile_bytes = tn * D * 4
    ids_tile_bytes = tn * 128 * 4
    onehot_bytes = tn * V * 4
    vmem_bytes = 2 * (2 * table_bytes + 2 * out_tile_bytes
                      + 2 * ids_tile_bytes + 2 * onehot_bytes)
    vmem_bytes = int(min(max(vmem_bytes, 4 << 20), 64 << 20))

    out = pl.pallas_call(
        kernel,
        out_shape=jax.ShapeDtypeStruct((Np, D), pe_weight.dtype),
        grid_spec=pltpu.PrefetchScalarGridSpec(
            num_scalar_prefetch=1,                                  # seed -> SMEM
            grid=grid,
            in_specs=[
                pl.BlockSpec((tn, 1), lambda i, seed: (i, 0)),      # ids block
                pl.BlockSpec((V, D), lambda i, seed: (0, 0)),       # full table, resident
            ],
            out_specs=pl.BlockSpec((tn, D), lambda i, seed: (i, 0)),
        ),
        compiler_params=pltpu.CompilerParams(
            dimension_semantics=("parallel",),                      # shard rows across TCs (v7x)
            vmem_limit_bytes=vmem_bytes),
    )(jnp.array([seed], dtype=jnp.int32), ids_flat, pe_weight)

    if Np != N:
        out = out[:N]
    return out.reshape(B, S, D)


if __name__ == "__main__":
    key = jax.random.PRNGKey(0)
    k_ids, k_emb = jax.random.split(key)

    B, S = 2, 8                 # batch, sequence
    num_embedding = 64          # vocabulary of time ids
    d_model = 128               # embedding width

    time_ids = jax.random.randint(k_ids, (B, S), 0, num_embedding, dtype=jnp.int32)
    # nn.Embedding default init is N(0, 1)
    pe_weight = jax.random.normal(k_emb, (num_embedding, d_model), dtype=jnp.float32)

    ref = jnp.take(pe_weight, time_ids, axis=0)

    # eval-mode forward (dropout = identity) -- must match the pure gather
    out_eval = embedding_positional_encoding(time_ids, pe_weight,
                                             dropout_p=0.1, training=False)
    out_eval = jax.block_until_ready(out_eval)
    assert out_eval.shape == (B, S, d_model)
    assert jnp.allclose(out_eval, ref, atol=1e-5, rtol=1e-5)

    # training-mode forward: every element is either 0 (dropped) or ref/(1-p)
    p = 0.1
    out_train = embedding_positional_encoding(time_ids, pe_weight,
                                              dropout_p=p, training=True, seed=123)
    out_train = jax.block_until_ready(out_train)
    assert out_train.shape == (B, S, d_model)
    scaled_ref = ref * (1.0 / (1.0 - p))
    ok = (out_train == 0.0) | jnp.isclose(out_train, scaled_ref, atol=1e-5, rtol=1e-5)
    assert bool(jnp.all(ok))

    print("KERNEL_OK")
</pallas_src>

<mosaic_0001>
module attributes {stable_mosaic.version = 11 : i64} {
  func.func @_embed_pe_kernel(%arg0: i32, %arg1: memref<1xi32, #tpu.memory_space<smem>>, %arg2: memref<16x1xi32, #tpu.memory_space<vmem>>, %arg3: memref<64x128xf32, #tpu.memory_space<vmem>>, %arg4: memref<16x128xf32, #tpu.memory_space<vmem>>) attributes {dimension_semantics = [#tpu.dimension_semantics<parallel>], iteration_bounds = array<i64: 1>, scalar_prefetch = 1 : i64, scratch_operands = 0 : i64, tpu.core_type = #tpu.core_type<tc>, window_params = [{transform_indices = @transform_0, window_bounds = array<i64: 16, 1>}, {pipeline_mode = #tpu.pipeline_mode<synchronous>, transform_indices = @transform_1, window_bounds = array<i64: 64, 128>}, {transform_indices = @transform_2, window_bounds = array<i64: 16, 128>}]} {
    %c0 = arith.constant 0 : index
    %c0_0 = arith.constant 0 : index
    %0 = vector.load %arg2[%c0, %c0_0] : memref<16x1xi32, #tpu.memory_space<vmem>>, vector<16x1xi32>
    %1 = tpu.iota {dimensions = array<i32: 1>} : vector<16x64xi32>
    %2 = vector.broadcast %0 : vector<16x1xi32> to vector<16x64xi32>
    %3 = arith.cmpi eq, %1, %2 : vector<16x64xi32>
    %4 = arith.extui %3 : vector<16x64xi1> to vector<16x64xi32>
    %5 = arith.sitofp %4 : vector<16x64xi32> to vector<16x64xf32>
    %c0_1 = arith.constant 0 : index
    %c0_2 = arith.constant 0 : index
    %6 = vector.load %arg3[%c0_1, %c0_2] : memref<64x128xf32, #tpu.memory_space<vmem>>, vector<64x128xf32>
    %cst = arith.constant dense<0.000000e+00> : vector<16x128xf32>
    %7 = tpu.matmul %5, %6, %cst {dimension_numbers = #tpu.dot_dimension_numbers<[1], [0], [0], [1], [0, 0, 1, 1], [], []>} : vector<16x64xf32>, vector<64x128xf32>, vector<16x128xf32> -> vector<16x128xf32>
    %c0_3 = arith.constant 0 : index
    %c0_4 = arith.constant 0 : index
    %8 = vector.load %arg4[%c0_3, %c0_4] : memref<16x128xf32, #tpu.memory_space<vmem>>, vector<16x128xf32>
    tpu.vector_store %arg4[%c0_3, %c0_4], %7 {strides = array<i32>} : memref<16x128xf32, #tpu.memory_space<vmem>>, vector<16x128xf32>,
    return
  }
  func.func @transform_0(%arg0: i32, %arg1: memref<1xi32, #tpu.memory_space<smem>>) -> (i32, i32) {
    %c0_i32 = arith.constant 0 : i32
    %c0_i32_0 = arith.constant 0 : i32
    return %arg0, %c0_i32 : i32, i32
  }
  func.func @transform_1(%arg0: i32, %arg1: memref<1xi32, #tpu.memory_space<smem>>) -> (i32, i32) {
    %c0_i32 = arith.constant 0 : i32
    %c0_i32_0 = arith.constant 0 : i32
    %c0_i32_1 = arith.constant 0 : i32
    return %c0_i32, %c0_i32_0 : i32, i32
  }
  func.func @transform_2(%arg0: i32, %arg1: memref<1xi32, #tpu.memory_space<smem>>) -> (i32, i32) {
    %c0_i32 = arith.constant 0 : i32
    %c0_i32_0 = arith.constant 0 : i32
    return %arg0, %c0_i32 : i32, i32
  }
}

</mosaic_0001>

<llo_original>
// kernel: tpu_custom_call.1
$region0: #{tpu_custom_call.1}
  #allocation0 [shape = 'u32[]', space=smem, size = 0x4, offset = 0x4, fixed_abs, tag = 'smem constant byte address 0x4 - core index']
  #allocation1 [shape = 'u32[144,128]{1,0:T(1,128)}', space=vmem, size = 0x12000, scoped, tag = 'internal scratch']
  #allocation2 [shape = 's32[1]{0}', space=sflag, size = 0x4, scoped, tag = 'scoped memory for tpu_custom_call.1']
  #allocation3 [shape = 's32[1]{0:T(128)S(6)}', space=smem, size = 0x200, scoped, tag = 'prefetched SMEM operand 0']
  %s0 = inlined_call_operand.<no memory space> [shape: s32[1], index: 0, kind: input, shape index: {}]
  %s1 = inlined_call_operand.vmem [shape: s32[16,1], index: 1, kind: input, shape index: {}]
  %s2 = inlined_call_operand.hbm [shape: f32[64,128], index: 2, kind: input, shape index: {}]
  %s3 = inlined_call_operand.hbm [shape: f32[16,128], index: 3, kind: output, shape index: {}]
  %s4 = sld [smem:[#allocation0]]
  $region22: #{tpu_custom_call.1} parent=0
    _
  %s6 = ssub.s32 1, %s4
  %s7 = scalar_select 0, %s6, %s4
  %8 = sst [smem:[#allocation3]] %s0
  $region1: #{tpu_custom_call.1} parent=0
    #allocation4 [shape = 'u8[32768]{0}', space=vmem, size = 0x8000, scoped, tag = 'input window, operand 2, single buffered']
    #allocation5 [shape = 's32[1]{0}', space=sflag, size = 0x4, scoped, tag = 'scoped memory for tpu_custom_call.1']
    #allocation6 [shape = 's32[1]{0}', space=sflag, size = 0x4, scoped, tag = 'scoped memory for tpu_custom_call.1']
    #allocation7 [shape = 'u8[8192]{0}', space=vmem, size = 0x2000, scoped, tag = 'output window, operand 0, single buffered']
    %9 = vsyncpa [#allocation5], 0
    %10 = vsyncpa [#allocation6], 0
    // Predicated region
    $region2: #{tpu_custom_call.1} parent=1 // pred_check
      _
    $region3: #{tpu_custom_call.1} parent=1 // pred_check_branch
      %12 = sbr.rel (0) target = $region5
    $region4: #{tpu_custom_call.1} parent=1 // pred_region
      _
    $region5: #{tpu_custom_call.1} parent=1 // pred_fallthru
      _
    // Predicated region
    $region6: #{tpu_custom_call.1} parent=1 // pred_check
      _
    $region7: #{tpu_custom_call.1} parent=1 // pred_check_branch
      %14 = sbr.rel (0) target = $region9
    $region8: #{tpu_custom_call.1} parent=1 // pred_region
      %s16 = ssub.s32 1024, 1024
      %17 = vsyncadd [#allocation5], %s16
      %s18 = sshll.u32 [#allocation4], 4
      %s19 = int_to_ptr.vmem [resolvable:$true] %s18
      %24 = dma.hbm_to_vmem [thread:$0]  %s2, 1024, %s19, [#allocation5], 128, 128, 8
    $region9: #{tpu_custom_call.1} parent=1 // pred_fallthru
      _
    // Predicated region
    $region10: #{tpu_custom_call.1} parent=1 // pred_check
      _
    $region11: #{tpu_custom_call.1} parent=1 // pred_check_branch
      %26 = sbr.rel (0) target = $region13
    $region12: #{tpu_custom_call.1} parent=1 // pred_region
      %27 = dma.done [#allocation5], 1024
    $region13: #{tpu_custom_call.1} parent=1 // pred_fallthru
      _
    %v28 = vld [vmem:[%s1] sm:$0xff]
    %v29 = vld [vmem:[%s1 + $0x8] sm:$0xff]
    %v30 = vlaneseq
    %v31 = vand.u32 %v30, 127
    %32 = vset.pattern.permute.xlu0 0
    %33 = vperm.xlu0 %32, %v28
    %v34 = vpop.permute.xlu0 %33
    %35 = vset.pattern.permute.xlu0 0
    %36 = vperm.xlu0 %35, %v29
    %v37 = vpop.permute.xlu0 %36
    %vm38 = vcmp.eq.s32.totalorder %v31, %v34
    %vm39 = vcmp.eq.s32.totalorder %v31, %v37
    %v40 = vsel %vm38, 1, 0
    %v41 = vsel %vm39, 1, 0
    %v42 = vcvt.s32.f32 %v40
    %v43 = vcvt.s32.f32 %v41
    %v44 = vld [vmem:[#allocation4] sm:$0xff]
    %v45 = vld [vmem:[#allocation4 + $0x8] sm:$0xff]
    %v46 = vld [vmem:[#allocation4 + $0x10] sm:$0xff]
    %v47 = vld [vmem:[#allocation4 + $0x18] sm:$0xff]
    %v48 = vld [vmem:[#allocation4 + $0x20] sm:$0xff]
    %v49 = vld [vmem:[#allocation4 + $0x28] sm:$0xff]
    %v50 = vld [vmem:[#allocation4 + $0x30] sm:$0xff]
    %v51 = vld [vmem:[#allocation4 + $0x38] sm:$0xff]
    %vm52 = vcmask 523264
    %v54 = vsel %vm52, %v42, 0
    %v57 = vsel %vm52, %v43, 0
    %59 = vmatprep.subr.mxu0 0.0
    %60 = vmatpush1.msra.mxu0 0.0
    %61 = vmatprep.subr.mxu0 0.0
    %62 = vmatpush1.msra.mxu0 0.0
    %63 = vmatprep.subr.mxu0 0.0
    %64 = vmatpush1.msra.mxu0 0.0
    %65 = vmatprep.subr.mxu0 0.0
    %66 = vmatpush1.msra.mxu0 0.0
    %67 = vmatprep.subr.mxu0 0.0
    %68 = vmatpush1.msra.mxu0 0.0
    %69 = vmatprep.subr.mxu0 0.0
    %70 = vmatpush1.msra.mxu0 0.0
    %71 = vmatprep.subr.mxu0 0.0
    %72 = vmatpush1.msra.mxu0 0.0
    %73 = vmatprep.subr.mxu0 0.0
    %74 = vmatpush1.msra.mxu0 0.0
    %75 = vmatprep.subr.mxu0 0.0
    %76 = vmatpush1.msra.mxu0 %v51
    %77 = vmatprep.subr.mxu0 0.0
    %78 = vmatpush1.msra.mxu0 %v50
    %79 = vmatprep.subr.mxu0 0.0
    %80 = vmatpush1.msra.mxu0 %v49
    %81 = vmatprep.subr.mxu0 0.0
    %82 = vmatpush1.msra.mxu0 %v48
    %83 = vmatprep.subr.mxu0 0.0
    %84 = vmatpush1.msra.mxu0 %v47
    %85 = vmatprep.subr.mxu0 0.0
    %86 = vmatpush1.msra.mxu0 %v46
    %87 = vmatprep.subr.mxu0 0.0
    %88 = vmatpush1.msra.mxu0 %v45
    %89 = vmatprep.subr.mxu0 0.0
    %90 = vmatpush1.msra.mxu0 %v44
    %91 = vmatprep.subr.mxu0 0.0
    %92 = vmatpush2.msra.mxu0 0.0
    %93 = vmatprep.subr.mxu0 0.0
    %94 = vmatpush2.msra.mxu0 0.0
    %95 = vmatprep.subr.mxu0 0.0
    %96 = vmatpush2.msra.mxu0 0.0
    %97 = vmatprep.subr.mxu0 0.0
    %98 = vmatpush2.msra.mxu0 0.0
    %99 = vmatprep.subr.mxu0 0.0
    %100 = vmatpush2.msra.mxu0 0.0
    %101 = vmatprep.subr.mxu0 0.0
    %102 = vmatpush2.msra.mxu0 0.0
    %103 = vmatprep.subr.mxu0 0.0
    %104 = vmatpush2.msra.mxu0 0.0
    %105 = vmatprep.subr.mxu0 0.0
    %106 = vmatpush2.msra.mxu0 0.0
    %107 = vmatprep.subr.mxu0 0.0
    %108 = vmatpush2.msra.mxu0 0.0
    %109 = vmatprep.subr.mxu0 0.0
    %110 = vmatpush2.msra.mxu0 0.0
    %111 = vmatprep.subr.mxu0 0.0
    %112 = vmatpush2.msra.mxu0 0.0
    %113 = vmatprep.subr.mxu0 0.0
    %114 = vmatpush2.msra.mxu0 0.0
    %115 = vmatprep.subr.mxu0 0.0
    %116 = vmatpush2.msra.mxu0 0.0
    %117 = vmatprep.subr.mxu0 0.0
    %118 = vmatpush2.msra.mxu0 0.0
    %119 = vmatprep.subr.mxu0 0.0
    %120 = vmatpush2.msra.mxu0 0.0
    %121 = vmatprep.subr.mxu0 0.0
    %122 = vmatpush2.msra.mxu0 0.0
    %123 = vmatprep.mubr.f32.mxu0 0.0
    %124 = vmatmul.mubr.f32.gmra.mxu0 %v54
    %v125 = vpop.f32.mrf.mxu0
    %v126 = vadd.f32 0.0, %v125
    %v127 = vpop.f32.mrf.mxu0
    %128 = vmatprep.mubr.f32.mxu0 0.0
    %129 = vmatmul.mubr.f32.gmra.mxu0 %v57
    %v130 = vpop.f32.mrf.mxu0
    %v131 = vadd.f32 0.0, %v130
    %v132 = vpop.f32.mrf.mxu0
    %133 = vdwg.mxu0
    %134 = vst [vmem:[#allocation7] sm:$0xff] %v126
    %135 = vst [vmem:[#allocation7 + $0x8] sm:$0xff] %v131
    // Predicated region
    $region14: #{tpu_custom_call.1} parent=1 // pred_check
      _
    $region15: #{tpu_custom_call.1} parent=1 // pred_check_branch
      %137 = sbr.rel (0) target = $region17
    $region16: #{tpu_custom_call.1} parent=1 // pred_region
      %s139 = ssub.s32 256, 256
      %140 = vsyncadd [#allocation6], %s139
      %s141 = sshll.u32 [#allocation7], 4
      %s142 = int_to_ptr.vmem [resolvable:$true] %s141
      %147 = dma.vmem_to_hbm [thread:$0]  %s142, 256, %s3, [#allocation6], 128, 128, 8
    $region17: #{tpu_custom_call.1} parent=1 // pred_fallthru
      _
    // Predicated region
    $region18: #{tpu_custom_call.1} parent=1 // pred_check
      _
    $region19: #{tpu_custom_call.1} parent=1 // pred_check_branch
      %149 = sbr.rel (0) target = $region21
    $region20: #{tpu_custom_call.1} parent=1 // pred_region
      %150 = dma.done [#allocation6], 256
    $region21: #{tpu_custom_call.1} parent=1 // pred_fallthru
      _
    %151 = vsyncpa [#allocation5], 1
    %152 = vsyncpa [#allocation6], 1

</llo_original>
